<compile_context>
chip_gen: v6e
topology: v6e:2x2x1
jax: 0.10.0
libtpu: 0.0.40
codegen_flags: <defaults>
</compile_context>

<pallas_src>
import functools

import jax
import jax.numpy as jnp
from jax.experimental import pallas as pl
from jax.experimental.pallas import tpu as pltpu


def _sum_exp_kernel(r_ref, x_ref, out_ref, *, bc, c, ts, lane, n_total,
                    t_per_p, needs_mask):
    """Accumulate sum over the spatial dim of exp(r_c * x) per (b, c).

    r_ref  : SMEM (C,) f32              scalar-prefetched per-channel r
    x_ref  : VMEM (BC, ts, 128)         lane/sublane-dense tile (native dtype)
    out_ref: VMEM (1, BC, AR, 128) f32  small accumulator block, resident
                                        across the 'arbitrary' t axis
    """
    p = pl.program_id(0)
    t = pl.program_id(1)

    @pl.when(t == 0)
    def _():
        out_ref[...] = jnp.zeros_like(out_ref)

    start_row = (p * t_per_p + t) * ts          # global 128-lane row offset

    def accumulate(mask):
        # Small static loop over the B*C slabs (BC is small here).
        # TODO(synk): for BC >> 16 move the batch axis into the grid instead
        # of this unrolled Python loop (vreg pressure / strided DMA).
        for i in range(bc):
            r_c = r_ref[i % c]                          # f32 scalar from SMEM
            slab = x_ref[i].astype(jnp.float32)         # (ts, 128), upcast here
            e = jnp.exp(r_c * slab)                     # EUP
            if mask is not None:
                e = jnp.where(mask, e, 0.0)             # zero invalid tail
            if ts % 8 == 0:
                # Free reshape (same physical (8,128) tiling) + VALU tree sum
                # -> accumulator stays (8, 128) regardless of tile size.
                e = e.reshape(ts // 8, 8, lane).sum(axis=0)
            out_ref[0, i] += e

    if needs_mask:
        tile_end = (start_row + ts) * lane

        @pl.when(tile_end <= n_total)                   # fully valid tile
        def _():
            accumulate(None)

        @pl.when(tile_end > n_total)                    # ragged last tile
        def _():
            rows = jax.lax.broadcasted_iota(jnp.int32, (ts, lane), 0)
            lanes = jax.lax.broadcasted_iota(jnp.int32, (ts, lane), 1)
            elem = (start_row + rows) * lane + lanes    # flat spatial index
            accumulate(elem < n_total)
    else:
        accumulate(None)


def _auto_partitions():
    """1 on single-TensorCore chips (v5e/v6e), 2 on v7x."""
    # TODO(synk): verify on v7x that the leading "parallel" grid axis actually
    # shards across both TensorCores; if not, switch to pltpu.CORE_PARALLEL or
    # pl.core_map with pltpu.create_tensorcore_mesh.
    try:
        kind = jax.devices()[0].device_kind.lower()
    except Exception:
        return 1
    return 2 if "v7" in kind else 1


def class_loss(x, r, gt, *, target_tile_bytes=8 << 20, num_partitions=None):
    """x: (B, C, D, H, W) any float dtype; r, gt: (1, C). Returns scalar f32 loss."""
    B, C, D, H, W = x.shape
    assert C == r.shape[1], "channel's size don't match"
    N = D * H * W
    BC = B * C
    LANE, SUB = 128, 8
    S = int(pl.cdiv(N, LANE))                 # number of 128-lane rows
    itemsize = jnp.dtype(x.dtype).itemsize

    if num_partitions is None:
        num_partitions = _auto_partitions()

    # ---- tile sizing: ~target_tile_bytes per grid step, rows multiple of 8 ----
    rows_cap = max(SUB, (target_tile_bytes // (BC * LANE * itemsize)) // SUB * SUB)
    ts = int(S) if rows_cap >= S else int(rows_cap)
    T_total = int(pl.cdiv(S, ts))

    # Partition split only when the tile count divides evenly (no fully-OOB
    # blocks); nudge the tile size down a little to make it split if possible.
    P = 1
    if num_partitions > 1 and T_total >= num_partitions:
        if T_total % num_partitions == 0:
            P = num_partitions
        else:
            for cand in range(ts - SUB, max(SUB, ts // 2) - 1, -SUB):
                if cand >= SUB and int(pl.cdiv(S, cand)) % num_partitions == 0:
                    ts = cand
                    T_total = int(pl.cdiv(S, ts))
                    P = num_partitions
                    break
    t_per_p = T_total // P

    # Ragged coverage (tile rows past S, or 128-pad past N) handled by the
    # in-kernel mask — no "- n_pad" correction needed.
    needs_mask = T_total * ts * LANE > N

    # ---- input view: free reshape when N % 128 == 0 (the common case) ----
    x_flat = x.reshape(BC, N)
    pad128 = S * LANE - N
    if pad128:
        # TODO(synk): N % 128 != 0 still pays one full-tensor pad copy; the
        # padded lanes are masked in-kernel so their value is irrelevant.
        x_flat = jnp.pad(x_flat, ((0, 0), (0, pad128)))
    x_tiled = x_flat.reshape(BC, S, LANE)

    r_f32 = r.reshape(C).astype(jnp.float32)

    acc_rows = SUB if ts % SUB == 0 else ts   # accumulator decoupled from ts

    in_tile_bytes = BC * ts * LANE * itemsize
    out_tile_bytes = BC * acc_rows * LANE * 4
    vmem_limit = int(min(48 << 20,
                         max(32 << 20, 2 * in_tile_bytes + 2 * out_tile_bytes
                             + (16 << 20))))

    kernel = functools.partial(
        _sum_exp_kernel, bc=BC, c=C, ts=ts, lane=LANE, n_total=N,
        t_per_p=t_per_p, needs_mask=needs_mask)

    partials = pl.pallas_call(
        kernel,
        out_shape=jax.ShapeDtypeStruct((P, BC, acc_rows, LANE), jnp.float32),
        grid_spec=pltpu.PrefetchScalarGridSpec(
            num_scalar_prefetch=1,                        # r -> SMEM
            grid=(P, t_per_p),
            in_specs=[
                pl.BlockSpec((BC, ts, LANE),
                             lambda p, t, r_s: (0, p * t_per_p + t, 0)),
            ],
            out_specs=pl.BlockSpec((1, BC, acc_rows, LANE),
                                   lambda p, t, r_s: (p, 0, 0, 0)),
        ),
        compiler_params=pltpu.CompilerParams(
            dimension_semantics=("parallel", "arbitrary"),
            vmem_limit_bytes=vmem_limit,
        ),
    )(r_f32, x_tiled)

    # ---- tiny (B*C element) epilogue in plain JAX ----
    total = jnp.sum(partials, axis=(0, 2, 3))             # (BC,)
    s = total.reshape(B, C) / jnp.float32(N)
    # Safe because r is clipped to [lower, upper] > 0 and exp(...) > 0, so
    # log(s) is finite and the division by r is well-defined.
    # TODO(synk): exp(r*x) can overflow f32 for r*x > ~88 (matches the PyTorch
    # reference); a streaming max-subtracted log-sum-exp would make it robust.
    logits = jnp.log(s) / r.astype(jnp.float32)            # (B, C)
    log_softmax = jax.nn.log_softmax(logits, axis=-1)
    return jnp.mean(-jnp.sum(gt.astype(jnp.float32) * log_softmax, axis=-1))


# ---------------- parameter / buffer setup (plain JAX glue) ----------------

def init_r(r_args, key):
    """Stand-in for torch Normal(mean, std).sample(), clipped to [lower, upper]."""
    vals = []
    for i, (mean, std, upper, lower) in enumerate(r_args):
        k = jax.random.fold_in(key, i)
        v = mean + std * jax.random.normal(k, (), dtype=jnp.float32)
        v = jnp.clip(v, lower, upper)
        vals.append(v)
    return jnp.stack(vals).reshape(1, len(r_args)).astype(jnp.float32)


def make_gt(num_classes):
    base = jnp.array([[0.4, 0.2, 0.15, 0.15, 0.1]], dtype=jnp.float32)[:, :num_classes]
    return jax.nn.softmax(base, axis=1)


def class_loss_ref(x, r, gt):
    """Pure-JAX reference mirroring the PyTorch forward."""
    B, C, D, H, W = x.shape
    xf = x.astype(jnp.float32)
    s = jnp.sum(jnp.exp(r[:, :, None, None, None] * xf), axis=(2, 3, 4)) / (D * H * W)
    logits = jnp.log(s) / r
    log_softmax = jax.nn.log_softmax(logits, axis=-1)
    return jnp.mean(-jnp.sum(gt * log_softmax, axis=-1))


if __name__ == "__main__":
    key = jax.random.PRNGKey(0)
    num_classes = 5

    # r_args: (mean, std, upper, lower) per class
    r_args = [(4.0, 0.5, 6.0, 2.0) for _ in range(num_classes)]
    r = init_r(r_args, jax.random.fold_in(key, 100))
    gt = make_gt(num_classes)

    # 1) demo shape: N = 2048 (128-aligned, tile-aligned) -> fast path, no mask.
    x1 = jax.random.normal(jax.random.fold_in(key, 1),
                           (2, num_classes, 8, 16, 16), dtype=jnp.float32)
    loss1 = jax.block_until_ready(jax.jit(class_loss)(x1, r, gt))
    ref1 = class_loss_ref(x1, r, gt)
    assert bool(jnp.isfinite(loss1)), "loss is not finite"
    assert jnp.allclose(loss1, ref1, rtol=1e-3, atol=1e-5), (float(loss1), float(ref1))

    # 2) N = 2560, tiny tiles -> ragged tile count, exercises the in-kernel
    #    tail mask (no wrapper-side jnp.pad at all).
    x2 = jax.random.normal(jax.random.fold_in(key, 2),
                           (2, num_classes, 4, 10, 64), dtype=jnp.float32)
    loss2 = jax.block_until_ready(
        jax.jit(functools.partial(class_loss, target_tile_bytes=1))(x2, r, gt))
    ref2 = class_loss_ref(x2, r, gt)
    assert jnp.allclose(loss2, ref2, rtol=1e-3, atol=1e-5), (float(loss2), float(ref2))

    # 3) N = 2000 (not a multiple of 128) -> pad-to-128 fallback + lane mask.
    x3 = jax.random.normal(jax.random.fold_in(key, 3),
                           (2, num_classes, 4, 10, 50), dtype=jnp.float32)
    loss3 = jax.block_until_ready(jax.jit(class_loss)(x3, r, gt))
    ref3 = class_loss_ref(x3, r, gt)
    assert jnp.allclose(loss3, ref3, rtol=1e-3, atol=1e-5), (float(loss3), float(ref3))

    print("KERNEL_OK")
</pallas_src>

<mosaic_0001>
module attributes {stable_mosaic.version = 11 : i64} {
  func.func @_sum_exp_kernel(%arg0: i32, %arg1: i32, %arg2: memref<5xf32, #tpu.memory_space<smem>>, %arg3: memref<10x16x128xf32, #tpu.memory_space<vmem>>, %arg4: memref<1x10x8x128xf32, #tpu.memory_space<vmem>>) attributes {dimension_semantics = [#tpu.dimension_semantics<parallel>, #tpu.dimension_semantics<arbitrary>], iteration_bounds = array<i64: 1, 1>, scalar_prefetch = 1 : i64, scratch_operands = 0 : i64, tpu.core_type = #tpu.core_type<tc>, window_params = [{transform_indices = @transform_0, window_bounds = array<i64: 10, 16, 128>}, {transform_indices = @transform_1, window_bounds = array<i64: 1, 10, 8, 128>}]} {
    %c0_i32 = arith.constant 0 : i32
    %0 = arith.cmpi eq, %arg1, %c0_i32 : i32
    %1 = arith.extui %0 : i1 to i32
    %c0_i32_0 = arith.constant 0 : i32
    %2 = arith.cmpi ne, %1, %c0_i32_0 : i32
    scf.if %2 {
      %cst_120 = arith.constant 0.000000e+00 : f32
      %143 = vector.broadcast %cst_120 : f32 to vector<1x10x8x128xf32>
      %c0_121 = arith.constant 0 : index
      %c0_122 = arith.constant 0 : index
      %c0_123 = arith.constant 0 : index
      %c0_124 = arith.constant 0 : index
      %144 = vector.load %arg4[%c0_121, %c0_122, %c0_123, %c0_124] : memref<1x10x8x128xf32, #tpu.memory_space<vmem>>, vector<1x10x8x128xf32>
      tpu.vector_store %arg4[%c0_121, %c0_122, %c0_123, %c0_124], %143 {strides = array<i32>} : memref<1x10x8x128xf32, #tpu.memory_space<vmem>>, vector<1x10x8x128xf32>,
    } else {
    }
    %c0 = arith.constant 0 : index
    %3 = memref.load %arg2[%c0] : memref<5xf32, #tpu.memory_space<smem>>
    %c0_1 = arith.constant 0 : index
    %c0_2 = arith.constant 0 : index
    %c0_3 = arith.constant 0 : index
    %4 = vector.load %arg3[%c0_1, %c0_2, %c0_3] : memref<10x16x128xf32, #tpu.memory_space<vmem>>, vector<1x16x128xf32>
    %5 = vector.shape_cast %4 : vector<1x16x128xf32> to vector<16x128xf32>
    %6 = vector.broadcast %3 : f32 to vector<16x128xf32>
    %7 = arith.mulf %6, %5 : vector<16x128xf32>
    %8 = math.exp %7 : vector<16x128xf32>
    %9 = vector.shape_cast %8 : vector<16x128xf32> to vector<2x8x128xf32>
    %cst = arith.constant dense<0.000000e+00> : vector<8x128xf32>
    %10 = vector.multi_reduction <add>, %9, %cst [0] : vector<2x8x128xf32> to vector<8x128xf32>
    %c0_4 = arith.constant 0 : index
    %c0_5 = arith.constant 0 : index
    %c0_6 = arith.constant 0 : index
    %c0_7 = arith.constant 0 : index
    %11 = vector.load %arg4[%c0_4, %c0_5, %c0_6, %c0_7] : memref<1x10x8x128xf32, #tpu.memory_space<vmem>>, vector<1x1x8x128xf32>
    %12 = vector.shape_cast %11 : vector<1x1x8x128xf32> to vector<8x128xf32>
    %13 = arith.addf %12, %10 : vector<8x128xf32>
    %c0_8 = arith.constant 0 : index
    %c0_9 = arith.constant 0 : index
    %c0_10 = arith.constant 0 : index
    %c0_11 = arith.constant 0 : index
    %14 = vector.load %arg4[%c0_8, %c0_9, %c0_10, %c0_11] : memref<1x10x8x128xf32, #tpu.memory_space<vmem>>, vector<1x1x8x128xf32>
    %15 = vector.shape_cast %14 : vector<1x1x8x128xf32> to vector<8x128xf32>
    %16 = vector.shape_cast %13 : vector<8x128xf32> to vector<1x1x8x128xf32>
    tpu.vector_store %arg4[%c0_8, %c0_9, %c0_10, %c0_11], %16 {strides = array<i32>} : memref<1x10x8x128xf32, #tpu.memory_space<vmem>>, vector<1x1x8x128xf32>,
    %c1 = arith.constant 1 : index
    %17 = memref.load %arg2[%c1] : memref<5xf32, #tpu.memory_space<smem>>
    %c1_12 = arith.constant 1 : index
    %c0_13 = arith.constant 0 : index
    %c0_14 = arith.constant 0 : index
    %18 = vector.load %arg3[%c1_12, %c0_13, %c0_14] : memref<10x16x128xf32, #tpu.memory_space<vmem>>, vector<1x16x128xf32>
    %19 = vector.shape_cast %18 : vector<1x16x128xf32> to vector<16x128xf32>
    %20 = vector.broadcast %17 : f32 to vector<16x128xf32>
    %21 = arith.mulf %20, %19 : vector<16x128xf32>
    %22 = math.exp %21 : vector<16x128xf32>
    %23 = vector.shape_cast %22 : vector<16x128xf32> to vector<2x8x128xf32>
    %cst_15 = arith.constant dense<0.000000e+00> : vector<8x128xf32>
    %24 = vector.multi_reduction <add>, %23, %cst_15 [0] : vector<2x8x128xf32> to vector<8x128xf32>
    %c0_16 = arith.constant 0 : index
    %c1_17 = arith.constant 1 : index
    %c0_18 = arith.constant 0 : index
    %c0_19 = arith.constant 0 : index
    %25 = vector.load %arg4[%c0_16, %c1_17, %c0_18, %c0_19] : memref<1x10x8x128xf32, #tpu.memory_space<vmem>>, vector<1x1x8x128xf32>
    %26 = vector.shape_cast %25 : vector<1x1x8x128xf32> to vector<8x128xf32>
    %27 = arith.addf %26, %24 : vector<8x128xf32>
    %c0_20 = arith.constant 0 : index
    %c1_21 = arith.constant 1 : index
    %c0_22 = arith.constant 0 : index
    %c0_23 = arith.constant 0 : index
    %28 = vector.load %arg4[%c0_20, %c1_21, %c0_22, %c0_23] : memref<1x10x8x128xf32, #tpu.memory_space<vmem>>, vector<1x1x8x128xf32>
    %29 = vector.shape_cast %28 : vector<1x1x8x128xf32> to vector<8x128xf32>
    %30 = vector.shape_cast %27 : vector<8x128xf32> to vector<1x1x8x128xf32>
    tpu.vector_store %arg4[%c0_20, %c1_21, %c0_22, %c0_23], %30 {strides = array<i32>} : memref<1x10x8x128xf32, #tpu.memory_space<vmem>>, vector<1x1x8x128xf32>,
    %c2 = arith.constant 2 : index
    %31 = memref.load %arg2[%c2] : memref<5xf32, #tpu.memory_space<smem>>
    %c2_24 = arith.constant 2 : index
    %c0_25 = arith.constant 0 : index
    %c0_26 = arith.constant 0 : index
    %32 = vector.load %arg3[%c2_24, %c0_25, %c0_26] : memref<10x16x128xf32, #tpu.memory_space<vmem>>, vector<1x16x128xf32>
    %33 = vector.shape_cast %32 : vector<1x16x128xf32> to vector<16x128xf32>
    %34 = vector.broadcast %31 : f32 to vector<16x128xf32>
    %35 = arith.mulf %34, %33 : vector<16x128xf32>
    %36 = math.exp %35 : vector<16x128xf32>
    %37 = vector.shape_cast %36 : vector<16x128xf32> to vector<2x8x128xf32>
    %cst_27 = arith.constant dense<0.000000e+00> : vector<8x128xf32>
    %38 = vector.multi_reduction <add>, %37, %cst_27 [0] : vector<2x8x128xf32> to vector<8x128xf32>
    %c0_28 = arith.constant 0 : index
    %c2_29 = arith.constant 2 : index
    %c0_30 = arith.constant 0 : index
    %c0_31 = arith.constant 0 : index
    %39 = vector.load %arg4[%c0_28, %c2_29, %c0_30, %c0_31] : memref<1x10x8x128xf32, #tpu.memory_space<vmem>>, vector<1x1x8x128xf32>
    %40 = vector.shape_cast %39 : vector<1x1x8x128xf32> to vector<8x128xf32>
    %41 = arith.addf %40, %38 : vector<8x128xf32>
    %c0_32 = arith.constant 0 : index
    %c2_33 = arith.constant 2 : index
    %c0_34 = arith.constant 0 : index
    %c0_35 = arith.constant 0 : index
    %42 = vector.load %arg4[%c0_32, %c2_33, %c0_34, %c0_35] : memref<1x10x8x128xf32, #tpu.memory_space<vmem>>, vector<1x1x8x128xf32>
    %43 = vector.shape_cast %42 : vector<1x1x8x128xf32> to vector<8x128xf32>
    %44 = vector.shape_cast %41 : vector<8x128xf32> to vector<1x1x8x128xf32>
    tpu.vector_store %arg4[%c0_32, %c2_33, %c0_34, %c0_35], %44 {strides = array<i32>} : memref<1x10x8x128xf32, #tpu.memory_space<vmem>>, vector<1x1x8x128xf32>,
    %c3 = arith.constant 3 : index
    %45 = memref.load %arg2[%c3] : memref<5xf32, #tpu.memory_space<smem>>
    %c3_36 = arith.constant 3 : index
    %c0_37 = arith.constant 0 : index
    %c0_38 = arith.constant 0 : index
    %46 = vector.load %arg3[%c3_36, %c0_37, %c0_38] : memref<10x16x128xf32, #tpu.memory_space<vmem>>, vector<1x16x128xf32>
    %47 = vector.shape_cast %46 : vector<1x16x128xf32> to vector<16x128xf32>
    %48 = vector.broadcast %45 : f32 to vector<16x128xf32>
    %49 = arith.mulf %48, %47 : vector<16x128xf32>
    %50 = math.exp %49 : vector<16x128xf32>
    %51 = vector.shape_cast %50 : vector<16x128xf32> to vector<2x8x128xf32>
    %cst_39 = arith.constant dense<0.000000e+00> : vector<8x128xf32>
    %52 = vector.multi_reduction <add>, %51, %cst_39 [0] : vector<2x8x128xf32> to vector<8x128xf32>
    %c0_40 = arith.constant 0 : index
    %c3_41 = arith.constant 3 : index
    %c0_42 = arith.constant 0 : index
    %c0_43 = arith.constant 0 : index
    %53 = vector.load %arg4[%c0_40, %c3_41, %c0_42, %c0_43] : memref<1x10x8x128xf32, #tpu.memory_space<vmem>>, vector<1x1x8x128xf32>
    %54 = vector.shape_cast %53 : vector<1x1x8x128xf32> to vector<8x128xf32>
    %55 = arith.addf %54, %52 : vector<8x128xf32>
    %c0_44 = arith.constant 0 : index
    %c3_45 = arith.constant 3 : index
    %c0_46 = arith.constant 0 : index
    %c0_47 = arith.constant 0 : index
    %56 = vector.load %arg4[%c0_44, %c3_45, %c0_46, %c0_47] : memref<1x10x8x128xf32, #tpu.memory_space<vmem>>, vector<1x1x8x128xf32>
    %57 = vector.shape_cast %56 : vector<1x1x8x128xf32> to vector<8x128xf32>
    %58 = vector.shape_cast %55 : vector<8x128xf32> to vector<1x1x8x128xf32>
    tpu.vector_store %arg4[%c0_44, %c3_45, %c0_46, %c0_47], %58 {strides = array<i32>} : memref<1x10x8x128xf32, #tpu.memory_space<vmem>>, vector<1x1x8x128xf32>,
    %c4 = arith.constant 4 : index
    %59 = memref.load %arg2[%c4] : memref<5xf32, #tpu.memory_space<smem>>
    %c4_48 = arith.constant 4 : index
    %c0_49 = arith.constant 0 : index
    %c0_50 = arith.constant 0 : index
    %60 = vector.load %arg3[%c4_48, %c0_49, %c0_50] : memref<10x16x128xf32, #tpu.memory_space<vmem>>, vector<1x16x128xf32>
    %61 = vector.shape_cast %60 : vector<1x16x128xf32> to vector<16x128xf32>
    %62 = vector.broadcast %59 : f32 to vector<16x128xf32>
    %63 = arith.mulf %62, %61 : vector<16x128xf32>
    %64 = math.exp %63 : vector<16x128xf32>
    %65 = vector.shape_cast %64 : vector<16x128xf32> to vector<2x8x128xf32>
    %cst_51 = arith.constant dense<0.000000e+00> : vector<8x128xf32>
    %66 = vector.multi_reduction <add>, %65, %cst_51 [0] : vector<2x8x128xf32> to vector<8x128xf32>
    %c0_52 = arith.constant 0 : index
    %c4_53 = arith.constant 4 : index
    %c0_54 = arith.constant 0 : index
    %c0_55 = arith.constant 0 : index
    %67 = vector.load %arg4[%c0_52, %c4_53, %c0_54, %c0_55] : memref<1x10x8x128xf32, #tpu.memory_space<vmem>>, vector<1x1x8x128xf32>
    %68 = vector.shape_cast %67 : vector<1x1x8x128xf32> to vector<8x128xf32>
    %69 = arith.addf %68, %66 : vector<8x128xf32>
    %c0_56 = arith.constant 0 : index
    %c4_57 = arith.constant 4 : index
    %c0_58 = arith.constant 0 : index
    %c0_59 = arith.constant 0 : index
    %70 = vector.load %arg4[%c0_56, %c4_57, %c0_58, %c0_59] : memref<1x10x8x128xf32, #tpu.memory_space<vmem>>, vector<1x1x8x128xf32>
    %71 = vector.shape_cast %70 : vector<1x1x8x128xf32> to vector<8x128xf32>
    %72 = vector.shape_cast %69 : vector<8x128xf32> to vector<1x1x8x128xf32>
    tpu.vector_store %arg4[%c0_56, %c4_57, %c0_58, %c0_59], %72 {strides = array<i32>} : memref<1x10x8x128xf32, #tpu.memory_space<vmem>>, vector<1x1x8x128xf32>,
    %c0_60 = arith.constant 0 : index
    %73 = memref.load %arg2[%c0_60] : memref<5xf32, #tpu.memory_space<smem>>
    %c5 = arith.constant 5 : index
    %c0_61 = arith.constant 0 : index
    %c0_62 = arith.constant 0 : index
    %74 = vector.load %arg3[%c5, %c0_61, %c0_62] : memref<10x16x128xf32, #tpu.memory_space<vmem>>, vector<1x16x128xf32>
    %75 = vector.shape_cast %74 : vector<1x16x128xf32> to vector<16x128xf32>
    %76 = vector.broadcast %73 : f32 to vector<16x128xf32>
    %77 = arith.mulf %76, %75 : vector<16x128xf32>
    %78 = math.exp %77 : vector<16x128xf32>
    %79 = vector.shape_cast %78 : vector<16x128xf32> to vector<2x8x128xf32>
    %cst_63 = arith.constant dense<0.000000e+00> : vector<8x128xf32>
    %80 = vector.multi_reduction <add>, %79, %cst_63 [0] : vector<2x8x128xf32> to vector<8x128xf32>
    %c0_64 = arith.constant 0 : index
    %c5_65 = arith.constant 5 : index
    %c0_66 = arith.constant 0 : index
    %c0_67 = arith.constant 0 : index
    %81 = vector.load %arg4[%c0_64, %c5_65, %c0_66, %c0_67] : memref<1x10x8x128xf32, #tpu.memory_space<vmem>>, vector<1x1x8x128xf32>
    %82 = vector.shape_cast %81 : vector<1x1x8x128xf32> to vector<8x128xf32>
    %83 = arith.addf %82, %80 : vector<8x128xf32>
    %c0_68 = arith.constant 0 : index
    %c5_69 = arith.constant 5 : index
    %c0_70 = arith.constant 0 : index
    %c0_71 = arith.constant 0 : index
    %84 = vector.load %arg4[%c0_68, %c5_69, %c0_70, %c0_71] : memref<1x10x8x128xf32, #tpu.memory_space<vmem>>, vector<1x1x8x128xf32>
    %85 = vector.shape_cast %84 : vector<1x1x8x128xf32> to vector<8x128xf32>
    %86 = vector.shape_cast %83 : vector<8x128xf32> to vector<1x1x8x128xf32>
    tpu.vector_store %arg4[%c0_68, %c5_69, %c0_70, %c0_71], %86 {strides = array<i32>} : memref<1x10x8x128xf32, #tpu.memory_space<vmem>>, vector<1x1x8x128xf32>,
    %c1_72 = arith.constant 1 : index
    %87 = memref.load %arg2[%c1_72] : memref<5xf32, #tpu.memory_space<smem>>
    %c6 = arith.constant 6 : index
    %c0_73 = arith.constant 0 : index
    %c0_74 = arith.constant 0 : index
    %88 = vector.load %arg3[%c6, %c0_73, %c0_74] : memref<10x16x128xf32, #tpu.memory_space<vmem>>, vector<1x16x128xf32>
    %89 = vector.shape_cast %88 : vector<1x16x128xf32> to vector<16x128xf32>
    %90 = vector.broadcast %87 : f32 to vector<16x128xf32>
    %91 = arith.mulf %90, %89 : vector<16x128xf32>
    %92 = math.exp %91 : vector<16x128xf32>
    %93 = vector.shape_cast %92 : vector<16x128xf32> to vector<2x8x128xf32>
    %cst_75 = arith.constant dense<0.000000e+00> : vector<8x128xf32>
    %94 = vector.multi_reduction <add>, %93, %cst_75 [0] : vector<2x8x128xf32> to vector<8x128xf32>
    %c0_76 = arith.constant 0 : index
    %c6_77 = arith.constant 6 : index
    %c0_78 = arith.constant 0 : index
    %c0_79 = arith.constant 0 : index
    %95 = vector.load %arg4[%c0_76, %c6_77, %c0_78, %c0_79] : memref<1x10x8x128xf32, #tpu.memory_space<vmem>>, vector<1x1x8x128xf32>
    %96 = vector.shape_cast %95 : vector<1x1x8x128xf32> to vector<8x128xf32>
    %97 = arith.addf %96, %94 : vector<8x128xf32>
    %c0_80 = arith.constant 0 : index
    %c6_81 = arith.constant 6 : index
    %c0_82 = arith.constant 0 : index
    %c0_83 = arith.constant 0 : index
    %98 = vector.load %arg4[%c0_80, %c6_81, %c0_82, %c0_83] : memref<1x10x8x128xf32, #tpu.memory_space<vmem>>, vector<1x1x8x128xf32>
    %99 = vector.shape_cast %98 : vector<1x1x8x128xf32> to vector<8x128xf32>
    %100 = vector.shape_cast %97 : vector<8x128xf32> to vector<1x1x8x128xf32>
    tpu.vector_store %arg4[%c0_80, %c6_81, %c0_82, %c0_83], %100 {strides = array<i32>} : memref<1x10x8x128xf32, #tpu.memory_space<vmem>>, vector<1x1x8x128xf32>,
    %c2_84 = arith.constant 2 : index
    %101 = memref.load %arg2[%c2_84] : memref<5xf32, #tpu.memory_space<smem>>
    %c7 = arith.constant 7 : index
    %c0_85 = arith.constant 0 : index
    %c0_86 = arith.constant 0 : index
    %102 = vector.load %arg3[%c7, %c0_85, %c0_86] : memref<10x16x128xf32, #tpu.memory_space<vmem>>, vector<1x16x128xf32>
    %103 = vector.shape_cast %102 : vector<1x16x128xf32> to vector<16x128xf32>
    %104 = vector.broadcast %101 : f32 to vector<16x128xf32>
    %105 = arith.mulf %104, %103 : vector<16x128xf32>
    %106 = math.exp %105 : vector<16x128xf32>
    %107 = vector.shape_cast %106 : vector<16x128xf32> to vector<2x8x128xf32>
    %cst_87 = arith.constant dense<0.000000e+00> : vector<8x128xf32>
    %108 = vector.multi_reduction <add>, %107, %cst_87 [0] : vector<2x8x128xf32> to vector<8x128xf32>
    %c0_88 = arith.constant 0 : index
    %c7_89 = arith.constant 7 : index
    %c0_90 = arith.constant 0 : index
    %c0_91 = arith.constant 0 : index
    %109 = vector.load %arg4[%c0_88, %c7_89, %c0_90, %c0_91] : memref<1x10x8x128xf32, #tpu.memory_space<vmem>>, vector<1x1x8x128xf32>
    %110 = vector.shape_cast %109 : vector<1x1x8x128xf32> to vector<8x128xf32>
    %111 = arith.addf %110, %108 : vector<8x128xf32>
    %c0_92 = arith.constant 0 : index
    %c7_93 = arith.constant 7 : index
    %c0_94 = arith.constant 0 : index
    %c0_95 = arith.constant 0 : index
    %112 = vector.load %arg4[%c0_92, %c7_93, %c0_94, %c0_95] : memref<1x10x8x128xf32, #tpu.memory_space<vmem>>, vector<1x1x8x128xf32>
    %113 = vector.shape_cast %112 : vector<1x1x8x128xf32> to vector<8x128xf32>
    %114 = vector.shape_cast %111 : vector<8x128xf32> to vector<1x1x8x128xf32>
    tpu.vector_store %arg4[%c0_92, %c7_93, %c0_94, %c0_95], %114 {strides = array<i32>} : memref<1x10x8x128xf32, #tpu.memory_space<vmem>>, vector<1x1x8x128xf32>,
    %c3_96 = arith.constant 3 : index
    %115 = memref.load %arg2[%c3_96] : memref<5xf32, #tpu.memory_space<smem>>
    %c8 = arith.constant 8 : index
    %c0_97 = arith.constant 0 : index
    %c0_98 = arith.constant 0 : index
    %116 = vector.load %arg3[%c8, %c0_97, %c0_98] : memref<10x16x128xf32, #tpu.memory_space<vmem>>, vector<1x16x128xf32>
    %117 = vector.shape_cast %116 : vector<1x16x128xf32> to vector<16x128xf32>
    %118 = vector.broadcast %115 : f32 to vector<16x128xf32>
    %119 = arith.mulf %118, %117 : vector<16x128xf32>
    %120 = math.exp %119 : vector<16x128xf32>
    %121 = vector.shape_cast %120 : vector<16x128xf32> to vector<2x8x128xf32>
    %cst_99 = arith.constant dense<0.000000e+00> : vector<8x128xf32>
    %122 = vector.multi_reduction <add>, %121, %cst_99 [0] : vector<2x8x128xf32> to vector<8x128xf32>
    %c0_100 = arith.constant 0 : index
    %c8_101 = arith.constant 8 : index
    %c0_102 = arith.constant 0 : index
    %c0_103 = arith.constant 0 : index
    %123 = vector.load %arg4[%c0_100, %c8_101, %c0_102, %c0_103] : memref<1x10x8x128xf32, #tpu.memory_space<vmem>>, vector<1x1x8x128xf32>
    %124 = vector.shape_cast %123 : vector<1x1x8x128xf32> to vector<8x128xf32>
    %125 = arith.addf %124, %122 : vector<8x128xf32>
    %c0_104 = arith.constant 0 : index
    %c8_105 = arith.constant 8 : index
    %c0_106 = arith.constant 0 : index
    %c0_107 = arith.constant 0 : index
    %126 = vector.load %arg4[%c0_104, %c8_105, %c0_106, %c0_107] : memref<1x10x8x128xf32, #tpu.memory_space<vmem>>, vector<1x1x8x128xf32>
    %127 = vector.shape_cast %126 : vector<1x1x8x128xf32> to vector<8x128xf32>
    %128 = vector.shape_cast %125 : vector<8x128xf32> to vector<1x1x8x128xf32>
    tpu.vector_store %arg4[%c0_104, %c8_105, %c0_106, %c0_107], %128 {strides = array<i32>} : memref<1x10x8x128xf32, #tpu.memory_space<vmem>>, vector<1x1x8x128xf32>,
    %c4_108 = arith.constant 4 : index
    %129 = memref.load %arg2[%c4_108] : memref<5xf32, #tpu.memory_space<smem>>
    %c9 = arith.constant 9 : index
    %c0_109 = arith.constant 0 : index
    %c0_110 = arith.constant 0 : index
    %130 = vector.load %arg3[%c9, %c0_109, %c0_110] : memref<10x16x128xf32, #tpu.memory_space<vmem>>, vector<1x16x128xf32>
    %131 = vector.shape_cast %130 : vector<1x16x128xf32> to vector<16x128xf32>
    %132 = vector.broadcast %129 : f32 to vector<16x128xf32>
    %133 = arith.mulf %132, %131 : vector<16x128xf32>
    %134 = math.exp %133 : vector<16x128xf32>
    %135 = vector.shape_cast %134 : vector<16x128xf32> to vector<2x8x128xf32>
    %cst_111 = arith.constant dense<0.000000e+00> : vector<8x128xf32>
    %136 = vector.multi_reduction <add>, %135, %cst_111 [0] : vector<2x8x128xf32> to vector<8x128xf32>
    %c0_112 = arith.constant 0 : index
    %c9_113 = arith.constant 9 : index
    %c0_114 = arith.constant 0 : index
    %c0_115 = arith.constant 0 : index
    %137 = vector.load %arg4[%c0_112, %c9_113, %c0_114, %c0_115] : memref<1x10x8x128xf32, #tpu.memory_space<vmem>>, vector<1x1x8x128xf32>
    %138 = vector.shape_cast %137 : vector<1x1x8x128xf32> to vector<8x128xf32>
    %139 = arith.addf %138, %136 : vector<8x128xf32>
    %c0_116 = arith.constant 0 : index
    %c9_117 = arith.constant 9 : index
    %c0_118 = arith.constant 0 : index
    %c0_119 = arith.constant 0 : index
    %140 = vector.load %arg4[%c0_116, %c9_117, %c0_118, %c0_119] : memref<1x10x8x128xf32, #tpu.memory_space<vmem>>, vector<1x1x8x128xf32>
    %141 = vector.shape_cast %140 : vector<1x1x8x128xf32> to vector<8x128xf32>
    %142 = vector.shape_cast %139 : vector<8x128xf32> to vector<1x1x8x128xf32>
    tpu.vector_store %arg4[%c0_116, %c9_117, %c0_118, %c0_119], %142 {strides = array<i32>} : memref<1x10x8x128xf32, #tpu.memory_space<vmem>>, vector<1x1x8x128xf32>,
    return
  }
  func.func @transform_0(%arg0: i32, %arg1: i32, %arg2: memref<5xf32, #tpu.memory_space<smem>>) -> (i32, i32, i32) {
    %c1_i32 = arith.constant 1 : i32
    %0 = arith.muli %arg0, %c1_i32 : i32
    %1 = arith.addi %0, %arg1 : i32
    %c0_i32 = arith.constant 0 : i32
    %c0_i32_0 = arith.constant 0 : i32
    %c0_i32_1 = arith.constant 0 : i32
    return %c0_i32, %1, %c0_i32_0 : i32, i32, i32
  }
  func.func @transform_1(%arg0: i32, %arg1: i32, %arg2: memref<5xf32, #tpu.memory_space<smem>>) -> (i32, i32, i32, i32) {
    %c0_i32 = arith.constant 0 : i32
    %c0_i32_0 = arith.constant 0 : i32
    %c0_i32_1 = arith.constant 0 : i32
    %c0_i32_2 = arith.constant 0 : i32
    return %arg0, %c0_i32, %c0_i32_0, %c0_i32_1 : i32, i32, i32, i32
  }
}

</mosaic_0001>

<llo_original>
// kernel: class_loss.1
$region0: #{class_loss.1}
  #allocation0 [shape = 'u32[]', space=smem, size = 0x4, offset = 0x4, fixed_abs, tag = 'smem constant byte address 0x4 - core index']
  #allocation1 [shape = 'u32[144,128]{1,0:T(1,128)}', space=vmem, size = 0x12000, scoped, tag = 'internal scratch']
  #allocation2 [shape = 's32[1]{0}', space=sflag, size = 0x4, scoped, tag = 'scoped memory for class_loss.1']
  #allocation3 [shape = 'u8[512]{0}', space=smem, size = 0x200, scoped, tag = 'prefetched SMEM operand 0']
  %s0 = inlined_call_operand.vmem [shape: f32[5], index: 0, kind: input, shape index: {}]
  %s1 = inlined_call_operand.vmem [shape: f32[10,16,128], index: 1, kind: input, shape index: {}]
  %s2 = inlined_call_operand.vmem [shape: f32[1,10,8,128], index: 2, kind: output, shape index: {}]
  %s3 = sld [smem:[#allocation0]]
  $region18: #{class_loss.1} parent=0
    _
  %s5 = ssub.s32 1, %s3
  %s6 = scalar_select 0, %s5, %s3
  %s7 = sshll.u32 %s0, 4
  %s8 = int_to_ptr.vmem [resolvable:$true] %s7
  %10 = dma.vmem_to_smem %s8, 16, [#allocation3], [#allocation2]
  %11 = dma.done [#allocation2], 16
  %12 = sfence
  // Predicated region
  $region2: #{class_loss.1} parent=0 // pred_check
    _
  $region3: #{class_loss.1} parent=0 // pred_check_branch
    %14 = sbr.rel (0) target = $region5
  $region4: #{class_loss.1} parent=0 // pred_region
    %s15 = sadd.s32 0, 0
    %s16 = smul.u32 2, %s15
    %p17 = scmp.lt.s32.totalorder %s16, 1
    %s18 = scalar_select %p17, %s16, 1
    %s19 = smul.addr %s18, 8
    %s20 = scalar_lea.vmem %s1, %s19
    %s21 = sadd.s32 0, 0
    %s22 = smul.u32 2, %s21
  $region5: #{class_loss.1} parent=0 // pred_fallthru
    _
  %s23 = sadd.s32 0, 0
  %s24 = smul.u32 2, %s23
  %p25 = scmp.lt.s32.totalorder %s24, 1
  %s26 = scalar_select %p25, %s24, 1
  %s27 = smul.addr %s26, 8
  %s28 = scalar_lea.vmem %s1, %s27
  %s29 = sadd.s32 0, 0
  %s30 = smul.u32 2, %s29
  %p31 = scmp.lt.s32.totalorder %s30, 1
  %s32 = scalar_select %p31, %s30, 1
  %s33 = smul.addr %s32, 8
  %s34 = scalar_lea.vmem %s1, %s33
  %s35 = sadd.s32 0, 0
  %s36 = smul.u32 2, %s35
  %p37 = scmp.eq.s32.totalorder 0, 0
  // Predicated region
  $region6: #{class_loss.1} parent=0 // pred_check
    %p38 = pneg %p37
  $region7: #{class_loss.1} parent=0 // pred_check_branch
    %40 = sbr.rel (%p38) target = $region9
  $region8: #{class_loss.1} parent=0 // pred_region
    %41 = vst [vmem:[%s2] sm:$0xff] 0.0
    %42 = vst [vmem:[%s2 + $0x8] sm:$0xff] 0.0
    %43 = vst [vmem:[%s2 + $0x10] sm:$0xff] 0.0
    %44 = vst [vmem:[%s2 + $0x18] sm:$0xff] 0.0
    %45 = vst [vmem:[%s2 + $0x20] sm:$0xff] 0.0
    %46 = vst [vmem:[%s2 + $0x28] sm:$0xff] 0.0
    %47 = vst [vmem:[%s2 + $0x30] sm:$0xff] 0.0
    %48 = vst [vmem:[%s2 + $0x38] sm:$0xff] 0.0
    %49 = vst [vmem:[%s2 + $0x40] sm:$0xff] 0.0
    %50 = vst [vmem:[%s2 + $0x48] sm:$0xff] 0.0
  $region9: #{class_loss.1} parent=0 // pred_fallthru
    _
  %s51 = sld [smem:[#allocation3]]
  %v52 = vld [vmem:[%s34] sm:$0xff]
  %v53 = vld [vmem:[%s34 + $0x8] sm:$0xff]
  %v54 = vstv %s51
  %v55 = vmul.f32 %v54, %v52
  %v56 = vmul.f32 %v54, %v53
  %v57 = vmul.f32 %v55, 1.442695
  %v58 = vpow.pop %v57
  %v59 = vmul.f32 %v56, 1.442695
  %v60 = vpow.pop %v59
  %v61 = vadd.f32 %v58, %v60
  %v62 = vld [vmem:[%s2] sm:$0xff]
  %v63 = vadd.f32 %v62, %v61
  %64 = vst [vmem:[%s2] sm:$0xff] %v63
  %s65 = sld [smem:[#allocation3 + $0x1]]
  %s66 = scalar_lea.vmem %s34, 16
  %v67 = vld [vmem:[%s66] sm:$0xff]
  %v68 = vld [vmem:[%s66 + $0x8] sm:$0xff]
  %v69 = vstv %s65
  %v70 = vmul.f32 %v69, %v67
  %v71 = vmul.f32 %v69, %v68
  %v72 = vmul.f32 %v70, 1.442695
  %v73 = vpow.pop %v72
  %v74 = vmul.f32 %v71, 1.442695
  %v75 = vpow.pop %v74
  %v76 = vadd.f32 %v73, %v75
  %s77 = scalar_lea.vmem %s2, 8
  %v78 = vld [vmem:[%s77] sm:$0xff]
  %v79 = vadd.f32 %v78, %v76
  %80 = vst [vmem:[%s77] sm:$0xff] %v79
  %s81 = sld [smem:[#allocation3 + $0x2]]
  %s82 = scalar_lea.vmem %s34, 32
  %v83 = vld [vmem:[%s82] sm:$0xff]
  %v84 = vld [vmem:[%s82 + $0x8] sm:$0xff]
  %v85 = vstv %s81
  %v86 = vmul.f32 %v85, %v83
  %v87 = vmul.f32 %v85, %v84
  %v88 = vmul.f32 %v86, 1.442695
  %v89 = vpow.pop %v88
  %v90 = vmul.f32 %v87, 1.442695
  %v91 = vpow.pop %v90
  %v92 = vadd.f32 %v89, %v91
  %s93 = scalar_lea.vmem %s2, 16
  %v94 = vld [vmem:[%s93] sm:$0xff]
  %v95 = vadd.f32 %v94, %v92
  %96 = vst [vmem:[%s93] sm:$0xff] %v95
  %s97 = sld [smem:[#allocation3 + $0x3]]
  %s98 = scalar_lea.vmem %s34, 48
  %v99 = vld [vmem:[%s98] sm:$0xff]
  %v100 = vld [vmem:[%s98 + $0x8] sm:$0xff]
  %v101 = vstv %s97
  %v102 = vmul.f32 %v101, %v99
  %v103 = vmul.f32 %v101, %v100
  %v104 = vmul.f32 %v102, 1.442695
  %v105 = vpow.pop %v104
  %v106 = vmul.f32 %v103, 1.442695
  %v107 = vpow.pop %v106
  %v108 = vadd.f32 %v105, %v107
  %s109 = scalar_lea.vmem %s2, 24
  %v110 = vld [vmem:[%s109] sm:$0xff]
  %v111 = vadd.f32 %v110, %v108
  %112 = vst [vmem:[%s109] sm:$0xff] %v111
  %s113 = sld [smem:[#allocation3 + $0x4]]
  %s114 = scalar_lea.vmem %s34, 64
  %v115 = vld [vmem:[%s114] sm:$0xff]
  %v116 = vld [vmem:[%s114 + $0x8] sm:$0xff]
  %v117 = vstv %s113
  %v118 = vmul.f32 %v117, %v115
  %v119 = vmul.f32 %v117, %v116
  %v120 = vmul.f32 %v118, 1.442695
  %v121 = vpow.pop %v120
  %v122 = vmul.f32 %v119, 1.442695
  %v123 = vpow.pop %v122
  %v124 = vadd.f32 %v121, %v123
  %s125 = scalar_lea.vmem %s2, 32
  %v126 = vld [vmem:[%s125] sm:$0xff]
  %v127 = vadd.f32 %v126, %v124
  %128 = vst [vmem:[%s125] sm:$0xff] %v127
  %s129 = sld [smem:[#allocation3]]
  %s130 = scalar_lea.vmem %s34, 80
  %v131 = vld [vmem:[%s130] sm:$0xff]
  %v132 = vld [vmem:[%s130 + $0x8] sm:$0xff]
  %v133 = vstv %s129
  %v134 = vmul.f32 %v133, %v131
  %v135 = vmul.f32 %v133, %v132
  %v136 = vmul.f32 %v134, 1.442695
  %v137 = vpow.pop %v136
  %v138 = vmul.f32 %v135, 1.442695
  %v139 = vpow.pop %v138
  %v140 = vadd.f32 %v137, %v139
  %s141 = scalar_lea.vmem %s2, 40
  %v142 = vld [vmem:[%s141] sm:$0xff]
  %v143 = vadd.f32 %v142, %v140
  %144 = vst [vmem:[%s141] sm:$0xff] %v143
  %s145 = sld [smem:[#allocation3 + $0x1]]
  %s146 = scalar_lea.vmem %s34, 96
  %v147 = vld [vmem:[%s146] sm:$0xff]
  %v148 = vld [vmem:[%s146 + $0x8] sm:$0xff]
  %v149 = vstv %s145
  %v150 = vmul.f32 %v149, %v147
  %v151 = vmul.f32 %v149, %v148
  %v152 = vmul.f32 %v150, 1.442695
  %v153 = vpow.pop %v152
  %v154 = vmul.f32 %v151, 1.442695
  %v155 = vpow.pop %v154
  %v156 = vadd.f32 %v153, %v155
  %s157 = scalar_lea.vmem %s2, 48
  %v158 = vld [vmem:[%s157] sm:$0xff]
  %v159 = vadd.f32 %v158, %v156
  %160 = vst [vmem:[%s157] sm:$0xff] %v159
  %s161 = sld [smem:[#allocation3 + $0x2]]
  %s162 = scalar_lea.vmem %s34, 112
  %v163 = vld [vmem:[%s162] sm:$0xff]
  %v164 = vld [vmem:[%s162 + $0x8] sm:$0xff]
  %v165 = vstv %s161
  %v166 = vmul.f32 %v165, %v163
  %v167 = vmul.f32 %v165, %v164
  %v168 = vmul.f32 %v166, 1.442695
  %v169 = vpow.pop %v168
  %v170 = vmul.f32 %v167, 1.442695
  %v171 = vpow.pop %v170
  %v172 = vadd.f32 %v169, %v171
  %s173 = scalar_lea.vmem %s2, 56
  %v174 = vld [vmem:[%s173] sm:$0xff]
  %v175 = vadd.f32 %v174, %v172
  %176 = vst [vmem:[%s173] sm:$0xff] %v175
  %s177 = sld [smem:[#allocation3 + $0x3]]
  %s178 = scalar_lea.vmem %s34, 128
  %v179 = vld [vmem:[%s178] sm:$0xff]
  %v180 = vld [vmem:[%s178 + $0x8] sm:$0xff]
  %v181 = vstv %s177
  %v182 = vmul.f32 %v181, %v179
  %v183 = vmul.f32 %v181, %v180
  %v184 = vmul.f32 %v182, 1.442695
  %v185 = vpow.pop %v184
  %v186 = vmul.f32 %v183, 1.442695
  %v187 = vpow.pop %v186
  %v188 = vadd.f32 %v185, %v187
  %s189 = scalar_lea.vmem %s2, 64
  %v190 = vld [vmem:[%s189] sm:$0xff]
  %v191 = vadd.f32 %v190, %v188
  %192 = vst [vmem:[%s189] sm:$0xff] %v191
  %s193 = sld [smem:[#allocation3 + $0x4]]
  %s194 = scalar_lea.vmem %s34, 144
  %v195 = vld [vmem:[%s194] sm:$0xff]
  %v196 = vld [vmem:[%s194 + $0x8] sm:$0xff]
  %v197 = vstv %s193
  %v198 = vmul.f32 %v197, %v195
  %v199 = vmul.f32 %v197, %v196
  %v200 = vmul.f32 %v198, 1.442695
  %v201 = vpow.pop %v200
  %v202 = vmul.f32 %v199, 1.442695
  %v203 = vpow.pop %v202
  %v204 = vadd.f32 %v201, %v203
  %s205 = scalar_lea.vmem %s2, 72
  %v206 = vld [vmem:[%s205] sm:$0xff]
  %v207 = vadd.f32 %v206, %v204
  %208 = vst [vmem:[%s205] sm:$0xff] %v207
  // Predicated region
  $region10: #{class_loss.1} parent=0 // pred_check
    _
  $region11: #{class_loss.1} parent=0 // pred_check_branch
    %210 = sbr.rel (0) target = $region13
  $region12: #{class_loss.1} parent=0 // pred_region
    _
  $region13: #{class_loss.1} parent=0 // pred_fallthru
    _
  // Predicated region
  $region14: #{class_loss.1} parent=0 // pred_check
    _
  $region15: #{class_loss.1} parent=0 // pred_check_branch
    %212 = sbr.rel (0) target = $region17
  $region16: #{class_loss.1} parent=0 // pred_region
    _
  $region17: #{class_loss.1} parent=0 // pred_fallthru
    _

</llo_original>
